<compile_context>
chip_gen: v5e
topology: v5e:2x2
jax: 0.10.0
libtpu: 0.0.40
codegen_flags: <defaults>
</compile_context>

<pallas_src>
import jax
import jax.numpy as jnp
from jax.experimental import pallas as pl
from jax.experimental.pallas import tpu as pltpu


def _vmem_budget_bytes():
    """~75% of this chip's physical VMEM (never request more than exists)."""
    try:
        cap = pltpu.get_tpu_info().vmem_capacity_bytes
    except Exception:
        cap = 64 * 1024 * 1024          # conservative fallback: v7x per-core VMEM
    return int(cap) * 3 // 4


# --------------------------- fast path: positions is None -------------------

def _broadcast_add_kernel(x_ref, pe_ref, o_ref):
    # x_ref: (TB, TC), pe_ref: (1, TC) -> broadcast add, full-block store.
    o_ref[...] = x_ref[...] + pe_ref[...]


def _broadcast_add(x, pos_emb):
    """x: (B, S, D); pos_emb: (S, D), already in x.dtype. Returns x + pos_emb[None]."""
    B, S, D = x.shape
    N = S * D
    itemsize = jnp.dtype(x.dtype).itemsize
    x2 = x.reshape(B, N)            # free reshape (contiguous), lane-dense last dim
    pe2 = pos_emb.reshape(1, N)

    target_block_bytes = 4 << 20    # ~4 MiB x-block: amortises per-step overhead on v7x
    if N % 128 == 0:
        TC = min(N, 4096)           # lane-dense, unmasked vst
    else:
        # Ragged last dim: keep whole rows per block (masked tail stores) but bound
        # the block bytes below so the scoped VMEM limit is never exceeded.
        # TODO(synk): pad D to a multiple of 128 in the wrapper if this path is hot.
        TC = N
    rows = max(1, target_block_bytes // (TC * itemsize))
    TB = B if B <= rows else max(8, (rows // 8) * 8)

    # Column tiles on the OUTER grid axis: pe's block index is constant across the
    # inner (row) loop, so the slab is fetched once per column tile.
    grid = (pl.cdiv(N, TC), pl.cdiv(B, TB))

    block_bytes = TB * TC * itemsize
    need = 4 * block_bytes + 2 * TC * itemsize + (2 << 20)
    vmem_limit = min(max(need, 32 << 20), _vmem_budget_bytes())

    out2 = pl.pallas_call(
        _broadcast_add_kernel,
        out_shape=jax.ShapeDtypeStruct((B, N), x.dtype),
        grid=grid,
        in_specs=[
            pl.BlockSpec((TB, TC), lambda j, i: (i, j)),   # x tile
            pl.BlockSpec((1, TC), lambda j, i: (0, j)),    # shared positional slab
        ],
        out_specs=pl.BlockSpec((TB, TC), lambda j, i: (i, j)),
        compiler_params=pltpu.CompilerParams(
            dimension_semantics=("parallel", "parallel"),
            vmem_limit_bytes=vmem_limit,
        ),
    )(x2, pe2)
    return out2.reshape(B, S, D)


# ---------------------- general path: explicit positions --------------------

def _onehot_gather_kernel(pos_ref, x_ref, emb_ref, o_ref):
    # pos_ref: (TR, 1) int32; x_ref/o_ref: (TR, D); emb_ref: (max_len, D).
    # Whole-tile gather via one-hot matmul on the MXU (no per-row masked stores).
    tr = x_ref.shape[0]
    max_len = emb_ref.shape[0]
    lanes = jax.lax.broadcasted_iota(jnp.int32, (tr, max_len), 1)
    onehot = (pos_ref[...] == lanes).astype(x_ref.dtype)          # sublane-broadcast cmp
    gathered = jnp.dot(onehot, emb_ref[...], preferred_element_type=jnp.float32)
    o_ref[...] = (x_ref[...] + gathered).astype(o_ref.dtype)


def _take_gather_kernel(pos_ref, x_ref, emb_ref, o_ref):
    # Large-table path: vectorised row gather from the resident VMEM table.
    tr = x_ref.shape[0]
    pos = pos_ref[...].reshape((tr,))
    gathered = jnp.take(emb_ref[...], pos, axis=0, mode="clip")    # (TR, D)
    o_ref[...] = (x_ref[...] + gathered).astype(o_ref.dtype)


def _gather_add(x, emb, positions):
    B, S, D = x.shape
    max_len = emb.shape[0]
    BS = B * S
    itemsize = jnp.dtype(x.dtype).itemsize

    x2 = x.reshape(BS, D)
    pos2 = positions.reshape(BS, 1).astype(jnp.int32)   # vector positions, VMEM

    # Row tile: big enough to amortise the ~0.35us/step overhead; 512 is a
    # multiple of every sublane pack (8/16/32 for f32/bf16/int8).
    TR = BS if BS <= 512 else 512
    grid = (pl.cdiv(BS, TR),)

    # The table's block index never changes -> it stays resident; single-buffer
    # it once it is big enough for the extra pipeline copy to matter.
    table_bytes = max_len * D * itemsize
    if table_bytes > (1 << 20):
        table_spec = pl.BlockSpec((max_len, D), lambda i: (0, 0),
                                  pipeline_mode=pl.Buffered(1))
        table_bufs = 1
    else:
        table_spec = pl.BlockSpec((max_len, D), lambda i: (0, 0))
        table_bufs = 2

    use_mxu_onehot = max_len <= 2048
    kernel = _onehot_gather_kernel if use_mxu_onehot else _take_gather_kernel
    # TODO(synk): for tables too large for the per-chip VMEM budget, keep the
    # table in HBM (memory_space=pl.ANY) and DMA only needed row chunks, or
    # cast the table to bf16.

    need = (table_bufs * table_bytes                 # resident table
            + 4 * TR * D * itemsize                  # x + out, double-buffered
            + 4 * TR * 4                             # positions blocks
            + (TR * max_len * itemsize if use_mxu_onehot else 0)
            + (4 << 20))                             # slack for internal scratch
    vmem_limit = min(max(need, 32 << 20), _vmem_budget_bytes())

    out2 = pl.pallas_call(
        kernel,
        out_shape=jax.ShapeDtypeStruct((BS, D), x.dtype),
        grid=grid,
        in_specs=[
            pl.BlockSpec((TR, 1), lambda i: (i, 0)),     # positions rows
            pl.BlockSpec((TR, D), lambda i: (i, 0)),     # x rows
            table_spec,                                  # full embedding table
        ],
        out_specs=pl.BlockSpec((TR, D), lambda i: (i, 0)),
        compiler_params=pltpu.CompilerParams(
            dimension_semantics=("parallel",),
            vmem_limit_bytes=vmem_limit,
        ),
    )(pos2, x2, emb)
    return out2.reshape(B, S, D)


# --------------------------------- wrapper -----------------------------------

def positional_encoding(x, emb_weight, positions=None):
    """Forward of PositionalEncoding: x + position_embeddings(positions).

    x: (B, S, D) float; emb_weight: (max_len, D); positions: optional int (B, S).
    """
    B, S, D = x.shape
    max_len = emb_weight.shape[0]
    emb_weight = emb_weight.astype(x.dtype)   # cast once, not per grid step

    if positions is None:
        if S > max_len:
            raise ValueError(f"seq_len {S} exceeds max_len {max_len}")
        # arange(S) gather == contiguous slice; identical for every batch row.
        pos_emb = jax.lax.slice_in_dim(emb_weight, 0, S, axis=0)   # (S, D)
        return _broadcast_add(x, pos_emb)

    return _gather_add(x, emb_weight, positions)


if __name__ == "__main__":
    # Small shapes consistent with the module's forward: batch=2, seq=8, d_model=32.
    B, S, D = 2, 8, 32
    MAX_LEN = 16  # stand-in for the module's max_len=5000, kept small for the test

    key = jax.random.PRNGKey(0)
    kx, kw, kp = jax.random.split(key, 3)
    x = jax.random.normal(kx, (B, S, D), dtype=jnp.float32)
    emb_weight = jax.random.normal(kw, (MAX_LEN, D), dtype=jnp.float32)

    # Default path: positions=None -> arange(S) broadcast over batch.
    out = jax.block_until_ready(positional_encoding(x, emb_weight))
    ref = x + emb_weight[jnp.arange(S)][None, :, :]
    assert out.shape == (B, S, D) and out.dtype == x.dtype
    assert jnp.allclose(out, ref, atol=1e-6, rtol=1e-6)

    # Explicit (data-dependent) positions path.
    positions = jax.random.randint(kp, (B, S), 0, MAX_LEN, dtype=jnp.int32)
    out2 = jax.block_until_ready(positional_encoding(x, emb_weight, positions))
    ref2 = x + emb_weight[positions]
    assert jnp.allclose(out2, ref2, atol=1e-6, rtol=1e-6)

    print("KERNEL_OK")
</pallas_src>

<mosaic_0001>
module attributes {stable_mosaic.version = 11 : i64} {
  func.func @_broadcast_add_kernel(%arg0: i32, %arg1: i32, %arg2: memref<2x256xf32, #tpu.memory_space<vmem>>, %arg3: memref<1x256xf32, #tpu.memory_space<vmem>>, %arg4: memref<2x256xf32, #tpu.memory_space<vmem>>) attributes {dimension_semantics = [#tpu.dimension_semantics<parallel>, #tpu.dimension_semantics<parallel>], iteration_bounds = array<i64: 1, 1>, scalar_prefetch = 0 : i64, scratch_operands = 0 : i64, tpu.core_type = #tpu.core_type<tc>, window_params = [{transform_indices = @transform_0, window_bounds = array<i64: 2, 256>}, {transform_indices = @transform_1, window_bounds = array<i64: 1, 256>}, {transform_indices = @transform_2, window_bounds = array<i64: 2, 256>}]} {
    %c0 = arith.constant 0 : index
    %c0_0 = arith.constant 0 : index
    %0 = vector.load %arg2[%c0, %c0_0] : memref<2x256xf32, #tpu.memory_space<vmem>>, vector<2x256xf32>
    %c0_1 = arith.constant 0 : index
    %c0_2 = arith.constant 0 : index
    %1 = vector.load %arg3[%c0_1, %c0_2] : memref<1x256xf32, #tpu.memory_space<vmem>>, vector<1x256xf32>
    %2 = vector.broadcast %1 : vector<1x256xf32> to vector<2x256xf32>
    %3 = arith.addf %0, %2 : vector<2x256xf32>
    %c0_3 = arith.constant 0 : index
    %c0_4 = arith.constant 0 : index
    %4 = vector.load %arg4[%c0_3, %c0_4] : memref<2x256xf32, #tpu.memory_space<vmem>>, vector<2x256xf32>
    tpu.vector_store %arg4[%c0_3, %c0_4], %3 {strides = array<i32>} : memref<2x256xf32, #tpu.memory_space<vmem>>, vector<2x256xf32>,
    return
  }
  func.func @transform_0(%arg0: i32, %arg1: i32) -> (i32, i32) {
    %c0_i32 = arith.constant 0 : i32
    return %arg1, %arg0 : i32, i32
  }
  func.func @transform_1(%arg0: i32, %arg1: i32) -> (i32, i32) {
    %c0_i32 = arith.constant 0 : i32
    %c0_i32_0 = arith.constant 0 : i32
    return %c0_i32, %arg0 : i32, i32
  }
  func.func @transform_2(%arg0: i32, %arg1: i32) -> (i32, i32) {
    %c0_i32 = arith.constant 0 : i32
    return %arg1, %arg0 : i32, i32
  }
}

</mosaic_0001>

<llo_original>
// kernel: tpu_custom_call.1
$region0: #{tpu_custom_call.1}
  #allocation0 [shape = 'u32[]', space=smem, size = 0x4, offset = 0x4, fixed_abs, tag = 'smem constant byte address 0x4 - core index']
  #allocation1 [shape = 'u32[72,128]{1,0:T(1,128)}', space=vmem, size = 0x9000, scoped, tag = 'internal scratch']
  %s0 = inlined_call_operand.hbm [shape: f32[2,256], index: 0, kind: input, shape index: {}]
  %s1 = inlined_call_operand.hbm [shape: f32[1,256], index: 1, kind: input, shape index: {}]
  %s2 = inlined_call_operand.hbm [shape: f32[2,256], index: 2, kind: output, shape index: {}]
  %s3 = sld [smem:[#allocation0]]
  $region26: #{tpu_custom_call.1} parent=0
    _
  %s5 = ssub.s32 1, %s3
  %s6 = scalar_select 0, %s5, %s3
  $region1: #{tpu_custom_call.1} parent=0
    #allocation2 [shape = 'u8[2048]{0}', space=vmem, size = 0x800, scoped, tag = 'input window, operand 0, single buffered']
    #allocation3 [shape = 's32[1]{0}', space=sflag, size = 0x4, scoped, tag = 'scoped memory for tpu_custom_call.1']
    #allocation4 [shape = 's32[1]{0}', space=sflag, size = 0x4, scoped, tag = 'scoped memory for tpu_custom_call.1']
    #allocation5 [shape = 'u8[1024]{0}', space=vmem, size = 0x400, scoped, tag = 'input window, operand 1, single buffered']
    #allocation6 [shape = 's32[1]{0}', space=sflag, size = 0x4, scoped, tag = 'scoped memory for tpu_custom_call.1']
    #allocation7 [shape = 'u8[2048]{0}', space=vmem, size = 0x800, scoped, tag = 'output window, operand 0, single buffered']
    %7 = vsyncpa [#allocation3], 0
    %8 = vsyncpa [#allocation6], 0
    %9 = vsyncpa [#allocation4], 0
    // Predicated region
    $region2: #{tpu_custom_call.1} parent=1 // pred_check
      _
    $region3: #{tpu_custom_call.1} parent=1 // pred_check_branch
      %11 = sbr.rel (0) target = $region5
    $region4: #{tpu_custom_call.1} parent=1 // pred_region
      %13 = vsyncadd [#allocation3], 0
      %s15 = sshll.u32 %s0, 4
      %s16 = int_to_ptr.hbm [resolvable:$true] %s15
      %s17 = sshll.u32 [#allocation2], 4
      %s18 = int_to_ptr.vmem [resolvable:$true] %s17
      %20 = dma.hbm_to_vmem [thread:$0]  %s16, 64, %s18, [#allocation3]
    $region5: #{tpu_custom_call.1} parent=1 // pred_fallthru
      _
    // Predicated region
    $region6: #{tpu_custom_call.1} parent=1 // pred_check
      _
    $region7: #{tpu_custom_call.1} parent=1 // pred_check_branch
      %22 = sbr.rel (0) target = $region9
    $region8: #{tpu_custom_call.1} parent=1 // pred_region
      %24 = vsyncadd [#allocation6], 0
      %s26 = sshll.u32 %s1, 4
      %s27 = int_to_ptr.hbm [resolvable:$true] %s26
      %s28 = sshll.u32 [#allocation5], 4
      %s29 = int_to_ptr.vmem [resolvable:$true] %s28
      %31 = dma.hbm_to_vmem [thread:$0]  %s27, 32, %s29, [#allocation6]
    $region9: #{tpu_custom_call.1} parent=1 // pred_fallthru
      _
    // Predicated region
    $region10: #{tpu_custom_call.1} parent=1 // pred_check
      _
    $region11: #{tpu_custom_call.1} parent=1 // pred_check_branch
      %33 = sbr.rel (0) target = $region13
    $region12: #{tpu_custom_call.1} parent=1 // pred_region
      %35 = dma.done [#allocation3], 64
    $region13: #{tpu_custom_call.1} parent=1 // pred_fallthru
      _
    // Predicated region
    $region14: #{tpu_custom_call.1} parent=1 // pred_check
      _
    $region15: #{tpu_custom_call.1} parent=1 // pred_check_branch
      %37 = sbr.rel (0) target = $region17
    $region16: #{tpu_custom_call.1} parent=1 // pred_region
      %39 = dma.done [#allocation6], 32
    $region17: #{tpu_custom_call.1} parent=1 // pred_fallthru
      _
    %v40 = vld [vmem:[#allocation2] sm:$0xf]
    %v41 = vld [vmem:[#allocation5] sm:$0x3]
    %v43 = vperm.slane %v41, 0
    %v44 = vperm.slane %v41, 1
    %v45 = vrot.slane %v44, 6
    %vm46 = vcmask 1041408
    %v47 = vsel %vm46, %v43, %v45
    %v49 = vadd.f32 %v40, %v47
    %50 = vst [vmem:[#allocation7] sm:$0xf] %v49
    // Predicated region
    $region18: #{tpu_custom_call.1} parent=1 // pred_check
      _
    $region19: #{tpu_custom_call.1} parent=1 // pred_check_branch
      %52 = sbr.rel (0) target = $region21
    $region20: #{tpu_custom_call.1} parent=1 // pred_region
      %54 = vsyncadd [#allocation4], 0
      %s56 = sshll.u32 [#allocation7], 4
      %s57 = int_to_ptr.vmem [resolvable:$true] %s56
      %s58 = sshll.u32 %s2, 4
      %s59 = int_to_ptr.hbm [resolvable:$true] %s58
      %61 = dma.vmem_to_hbm [thread:$0]  %s57, 64, %s59, [#allocation4]
    $region21: #{tpu_custom_call.1} parent=1 // pred_fallthru
      _
    // Predicated region
    $region22: #{tpu_custom_call.1} parent=1 // pred_check
      _
    $region23: #{tpu_custom_call.1} parent=1 // pred_check_branch
      %63 = sbr.rel (0) target = $region25
    $region24: #{tpu_custom_call.1} parent=1 // pred_region
      %65 = dma.done [#allocation4], 64
    $region25: #{tpu_custom_call.1} parent=1 // pred_fallthru
      _
    %66 = vsyncpa [#allocation3], 1
    %67 = vsyncpa [#allocation6], 1
    %68 = vsyncpa [#allocation4], 1

</llo_original>
